<compile_context>
chip_gen: v7x
topology: tpu7x:2x2x1
jax: 0.10.0
libtpu: 0.0.40
codegen_flags: <defaults>
</compile_context>

<pallas_src>
import functools

import jax
import jax.numpy as jnp
import numpy as np
from jax.experimental import pallas as pl
from jax.experimental.pallas import tpu as pltpu


def _decode_edge_kernel(v_ref, vt_ref, w1_ref, b1_ref, w2_ref, b2_ref,
                        w3_ref, b3_ref, w4_ref, b4_ref, out_ref,
                        *, compute_dtype):
    bb, N, D = v_ref.shape
    ti = vt_ref.shape[1]
    F = w4_ref.shape[1]
    full_tile = (ti == N)
    cd = compute_dtype
    f32 = jnp.float32
    relu = lambda a: jnp.maximum(a, 0.0)

    # --- l1 / l2 over every row we need (all N rows for e_v / q_j, plus the
    # --- ti output rows of this grid step) as single fused dots.
    x_full = v_ref[...].reshape(bb * N, D)
    if full_tile:
        x_all = x_full
    else:
        x_all = jnp.concatenate(
            [x_full, vt_ref[...].reshape(bb * ti, D)], axis=0)

    v1 = relu(jnp.dot(x_all.astype(cd), w1_ref[...],
                      preferred_element_type=f32) + b1_ref[...])
    u = jnp.dot(v1.astype(cd), w2_ref[...], preferred_element_type=f32)
    u_full = u[:bb * N].reshape(bb, N, D)
    u_t = u_full if full_tile else u[bb * N:].reshape(bb, ti, D)

    b2v = b2_ref[...]
    # e block for this step's output rows: e[b,i,j] = relu(u_i + u_j + b2).
    e_t = relu(u_t[:, :, None, :] + u_full[:, None, :, :] + b2v)   # (bb,ti,N,D)
    ev_t = jnp.max(e_t, axis=2)                                    # (bb,ti,D)

    # max_j e[b,r,j] for ALL rows r (needed for the q_j term), streamed in
    # ti-row chunks so only one (bb, ti, N, D) slab is live at a time.
    if full_tile:
        ev_pre = ev_t.reshape(bb * N, D)
    else:
        chunks = []
        for c in range(N // ti):
            uc = u_full[:, c * ti:(c + 1) * ti, :]
            ec = relu(uc[:, :, None, :] + u_full[:, None, :, :] + b2v)
            chunks.append(jnp.max(ec, axis=2))
        ev_full = jnp.concatenate(chunks, axis=1)                  # (bb,N,D)
        ev_pre = jnp.concatenate(
            [ev_full.reshape(bb * N, D), ev_t.reshape(bb * ti, D)], axis=0)

    # --- l3: single dot over all-row + tile-row maxima.
    e_v = relu(jnp.dot(ev_pre.astype(cd), w3_ref[...],
                       preferred_element_type=f32) + b3_ref[...])

    # --- l4: fuse e@W4 with q = e_v@W4 into one MXU push.
    rows = jnp.concatenate([e_t.reshape(bb * ti * N, D), e_v], axis=0)
    prod = jnp.dot(rows.astype(cd), w4_ref[...], preferred_element_type=f32)
    n0 = bb * ti * N
    e_w4 = prod[:n0].reshape(bb, ti, N, F)
    q_all = prod[n0:n0 + bb * N].reshape(bb, N, F)                 # q_j term
    q_t = q_all if full_tile else prod[n0 + bb * N:].reshape(bb, ti, F)

    out = e_w4 + q_t[:, :, None, :] + q_all[:, None, :, :] + b4_ref[...]
    out = out.astype(out_ref.dtype)

    if out_ref.ndim == 3:    # F < 128: lane-merged (j, F) -> N*F, unmasked vst
        out_ref[...] = out.reshape(bb, ti, N * F)
    else:                    # F >= 128: already lane-dense, store directly
        out_ref[...] = out


def decode_edge(v, w1, b1, w2, b2, w3, b3, w4, b4, *,
                batch_block=None, i_block=None,
                compute_dtype=jnp.bfloat16, out_dtype=None):
    """v: (B, N, D); weights stored (in, out); biases (1, out). Returns (B, N, N, F)."""
    B, N, D = v.shape
    F_out = w4.shape[1]
    if out_dtype is None:
        out_dtype = v.dtype
    out_bytes = jnp.dtype(out_dtype).itemsize

    # >= 2 parallel grid steps over the batch by default (keeps both v7x TCs
    # busy, halves per-core VMEM); fall back to 1 if it would not divide B.
    if batch_block is None:
        batch_block = max(1, B // 2)
        if B % batch_block != 0:
            batch_block = 1
    assert B % batch_block == 0, "batch_block must divide B"

    # i-tile: largest tile (multiple of 8 dividing N) whose output block stays
    # ~<= 2 MiB so the HBM writeback pipelines (store-bound at production size).
    if i_block is None:
        i_block = N
        target = 2 << 20
        while (i_block % 2 == 0 and (i_block // 2) % 8 == 0
               and batch_block * i_block * N * F_out * out_bytes > target):
            i_block //= 2
    assert N % i_block == 0 and (i_block == N or i_block % 8 == 0)

    lane_merge = F_out < 128
    grid = (B // batch_block, N // i_block)
    wmap = lambda g, i: (0, 0)

    in_specs = [
        # v twice: all N rows (for u / e_v / q_j) and the ti output rows of
        # this grid step (avoids dynamic value-slicing by a traced grid index).
        pl.BlockSpec((batch_block, N, D), lambda g, i: (g, 0, 0)),
        pl.BlockSpec((batch_block, i_block, D), lambda g, i: (g, i, 0)),
        pl.BlockSpec((D, D), wmap), pl.BlockSpec((1, D), wmap),
        pl.BlockSpec((D, D), wmap), pl.BlockSpec((1, D), wmap),
        pl.BlockSpec((D, D), wmap), pl.BlockSpec((1, D), wmap),
        pl.BlockSpec((D, F_out), wmap), pl.BlockSpec((1, F_out), wmap),
    ]
    if lane_merge:
        out_shape = jax.ShapeDtypeStruct((B, N, N * F_out), out_dtype)
        out_spec = pl.BlockSpec((batch_block, i_block, N * F_out),
                                lambda g, i: (g, i, 0))
    else:
        out_shape = jax.ShapeDtypeStruct((B, N, N, F_out), out_dtype)
        out_spec = pl.BlockSpec((batch_block, i_block, N, F_out),
                                lambda g, i: (g, i, 0, 0))

    # Explicit scoped-VMEM budget: block math (double-buffered in/out, e slabs,
    # small row matrices), conservatively in f32, with extra headroom.
    est = 4 * (2 * 2 * (batch_block * N * D + batch_block * i_block * D)
               + 2 * (3 * D * D + D * F_out + 3 * D + F_out)
               + 2 * batch_block * i_block * N * F_out
               + 4 * batch_block * i_block * N * D
               + 8 * batch_block * N * D)
    vmem_limit = int(min(max(4 * est, 32 << 20), 64 << 20))

    flops = (3 * 2 * B * N * D * D                 # l1, l2, l3
             + 2 * B * N * (N + 1) * D * F_out     # l4 on e and on e_v (q)
             + 5 * B * N * N * D                   # pair sum + relu + max
             + 3 * B * N * N * F_out)              # q_i + q_j + b4 adds
    bytes_accessed = (B * N * D * v.dtype.itemsize
                      + (3 * D * D + D * F_out) * 2 + (3 * D + F_out) * 4
                      + B * N * N * F_out * out_bytes)
    cost = pl.CostEstimate(flops=int(flops), transcendentals=0,
                           bytes_accessed=int(bytes_accessed))

    kernel = functools.partial(_decode_edge_kernel, compute_dtype=compute_dtype)

    out = pl.pallas_call(
        kernel,
        out_shape=out_shape,
        grid_spec=pltpu.PrefetchScalarGridSpec(
            num_scalar_prefetch=0,
            grid=grid,
            in_specs=in_specs,
            out_specs=out_spec,
        ),
        compiler_params=pltpu.CompilerParams(
            dimension_semantics=("parallel", "parallel"),
            vmem_limit_bytes=vmem_limit),
        cost_estimate=cost,
    )(v, v,
      w1.astype(compute_dtype), b1.astype(jnp.float32),
      w2.astype(compute_dtype), b2.astype(jnp.float32),
      w3.astype(compute_dtype), b3.astype(jnp.float32),
      w4.astype(compute_dtype), b4.astype(jnp.float32))

    if lane_merge:
        out = out.reshape(B, N, N, F_out)   # layout plumbing back to (B,N,N,F)
    return out


def decode_edge_ref(v, w1, b1, w2, b2, w3, b3, w4, b4):
    """Pure-JAX f32 reference (mirrors the PyTorch forward exactly)."""
    relu = lambda x: jnp.maximum(x, 0.0)
    v1 = relu(v @ w1 + b1)                                  # (B,N,D)
    e = relu(v1[:, None, :, :] + v1[:, :, None, :])         # (B,N,N,D)
    e = relu(e @ w2 + b2)
    e_v = jnp.max(e, axis=2)
    e_v = relu(e_v @ w3 + b3)
    e2 = relu(e_v[:, None, :, :] + e_v[:, :, None, :])
    return (e + e2) @ w4 + b4


if __name__ == "__main__":
    B, N, D, F_out = 2, 8, 32, 16

    key = jax.random.PRNGKey(0)
    ks = jax.random.split(key, 9)
    # Deterministic synthetic parameters; weights stored as (in, out).
    w1 = 0.1 * jax.random.normal(ks[0], (D, D), jnp.float32)
    b1 = 0.1 * jax.random.normal(ks[1], (1, D), jnp.float32)
    w2 = 0.1 * jax.random.normal(ks[2], (D, D), jnp.float32)
    b2 = 0.1 * jax.random.normal(ks[3], (1, D), jnp.float32)
    w3 = 0.1 * jax.random.normal(ks[4], (D, D), jnp.float32)
    b3 = 0.1 * jax.random.normal(ks[5], (1, D), jnp.float32)
    w4 = 0.1 * jax.random.normal(ks[6], (D, F_out), jnp.float32)
    b4 = 0.1 * jax.random.normal(ks[7], (1, F_out), jnp.float32)
    v = jax.random.normal(ks[8], (B, N, D), jnp.float32)

    ref = decode_edge_ref(v, w1, b1, w2, b2, w3, b3, w4, b4)

    # 1) f32-compute path: tight check of the algebraic rewrite / tiling.
    out_f32 = decode_edge(v, w1, b1, w2, b2, w3, b3, w4, b4,
                          compute_dtype=jnp.float32)
    out_f32 = jax.block_until_ready(out_f32)
    np.testing.assert_allclose(np.asarray(out_f32), np.asarray(ref),
                               rtol=2e-5, atol=2e-5)

    # 2) default bf16-MXU path (production config): widened tolerance for the
    #    bf16 operand rounding (f32 accumulation is kept inside the dots).
    out_bf16 = decode_edge(v, w1, b1, w2, b2, w3, b3, w4, b4)
    out_bf16 = jax.block_until_ready(out_bf16)
    np.testing.assert_allclose(np.asarray(out_bf16), np.asarray(ref),
                               rtol=5e-2, atol=5e-2)

    print("KERNEL_OK")
</pallas_src>

<mosaic_0001>
module attributes {stable_mosaic.version = 11 : i64} {
  func.func @_decode_edge_kernel(%arg0: i32, %arg1: i32, %arg2: memref<1x8x32xf32, #tpu.memory_space<vmem>>, %arg3: memref<1x8x32xf32, #tpu.memory_space<vmem>>, %arg4: memref<32x32xf32, #tpu.memory_space<vmem>>, %arg5: memref<1x32xf32, #tpu.memory_space<vmem>>, %arg6: memref<32x32xf32, #tpu.memory_space<vmem>>, %arg7: memref<1x32xf32, #tpu.memory_space<vmem>>, %arg8: memref<32x32xf32, #tpu.memory_space<vmem>>, %arg9: memref<1x32xf32, #tpu.memory_space<vmem>>, %arg10: memref<32x16xf32, #tpu.memory_space<vmem>>, %arg11: memref<1x16xf32, #tpu.memory_space<vmem>>, %arg12: memref<1x8x128xf32, #tpu.memory_space<vmem>>) attributes {dimension_semantics = [#tpu.dimension_semantics<parallel>, #tpu.dimension_semantics<parallel>], iteration_bounds = array<i64: 2, 1>, scalar_prefetch = 0 : i64, scratch_operands = 0 : i64, tpu.core_type = #tpu.core_type<tc>, window_params = [{transform_indices = @transform_0, window_bounds = array<i64: 1, 8, 32>}, {transform_indices = @transform_1, window_bounds = array<i64: 1, 8, 32>}, {pipeline_mode = #tpu.pipeline_mode<synchronous>, transform_indices = @transform_2, window_bounds = array<i64: 32, 32>}, {pipeline_mode = #tpu.pipeline_mode<synchronous>, transform_indices = @transform_3, window_bounds = array<i64: 1, 32>}, {pipeline_mode = #tpu.pipeline_mode<synchronous>, transform_indices = @transform_4, window_bounds = array<i64: 32, 32>}, {pipeline_mode = #tpu.pipeline_mode<synchronous>, transform_indices = @transform_5, window_bounds = array<i64: 1, 32>}, {pipeline_mode = #tpu.pipeline_mode<synchronous>, transform_indices = @transform_6, window_bounds = array<i64: 32, 32>}, {pipeline_mode = #tpu.pipeline_mode<synchronous>, transform_indices = @transform_7, window_bounds = array<i64: 1, 32>}, {pipeline_mode = #tpu.pipeline_mode<synchronous>, transform_indices = @transform_8, window_bounds = array<i64: 32, 16>}, {pipeline_mode = #tpu.pipeline_mode<synchronous>, transform_indices = @transform_9, window_bounds = array<i64: 1, 16>}, {transform_indices = @transform_10, window_bounds = array<i64: 1, 8, 128>}]} {
    %c0 = arith.constant 0 : index
    %c0_0 = arith.constant 0 : index
    %c0_1 = arith.constant 0 : index
    %0 = vector.load %arg2[%c0, %c0_0, %c0_1] : memref<1x8x32xf32, #tpu.memory_space<vmem>>, vector<1x8x32xf32>
    %1 = vector.shape_cast %0 : vector<1x8x32xf32> to vector<8x32xf32>
    %c0_2 = arith.constant 0 : index
    %c0_3 = arith.constant 0 : index
    %2 = vector.load %arg4[%c0_2, %c0_3] : memref<32x32xf32, #tpu.memory_space<vmem>>, vector<32x32xf32>
    %cst = arith.constant dense<0.000000e+00> : vector<8x32xf32>
    %3 = tpu.matmul %1, %2, %cst {dimension_numbers = #tpu.dot_dimension_numbers<[1], [0], [0], [1], [0, 0, 1, 1], [], []>} : vector<8x32xf32>, vector<32x32xf32>, vector<8x32xf32> -> vector<8x32xf32>
    %c0_4 = arith.constant 0 : index
    %c0_5 = arith.constant 0 : index
    %4 = vector.load %arg5[%c0_4, %c0_5] : memref<1x32xf32, #tpu.memory_space<vmem>>, vector<1x32xf32>
    %5 = vector.broadcast %4 : vector<1x32xf32> to vector<8x32xf32>
    %6 = arith.addf %3, %5 : vector<8x32xf32>
    %cst_6 = arith.constant 0.000000e+00 : f32
    %7 = vector.broadcast %cst_6 : f32 to vector<8x32xf32>
    %8 = arith.maximumf %6, %7 : vector<8x32xf32>
    %c0_7 = arith.constant 0 : index
    %c0_8 = arith.constant 0 : index
    %9 = vector.load %arg6[%c0_7, %c0_8] : memref<32x32xf32, #tpu.memory_space<vmem>>, vector<32x32xf32>
    %cst_9 = arith.constant dense<0.000000e+00> : vector<8x32xf32>
    %10 = tpu.matmul %8, %9, %cst_9 {dimension_numbers = #tpu.dot_dimension_numbers<[1], [0], [0], [1], [0, 0, 1, 1], [], []>} : vector<8x32xf32>, vector<32x32xf32>, vector<8x32xf32> -> vector<8x32xf32>
    %11 = vector.shape_cast %10 : vector<8x32xf32> to vector<1x8x32xf32>
    %c0_10 = arith.constant 0 : index
    %c0_11 = arith.constant 0 : index
    %12 = vector.load %arg7[%c0_10, %c0_11] : memref<1x32xf32, #tpu.memory_space<vmem>>, vector<1x32xf32>
    %13 = vector.shape_cast %11 : vector<1x8x32xf32> to vector<1x8x1x32xf32>
    %14 = vector.shape_cast %11 : vector<1x8x32xf32> to vector<1x1x8x32xf32>
    %15 = vector.broadcast %13 : vector<1x8x1x32xf32> to vector<1x8x8x32xf32>
    %16 = vector.broadcast %14 : vector<1x1x8x32xf32> to vector<1x8x8x32xf32>
    %17 = arith.addf %15, %16 : vector<1x8x8x32xf32>
    %18 = vector.shape_cast %12 : vector<1x32xf32> to vector<1x1x1x32xf32>
    %19 = vector.broadcast %18 : vector<1x1x1x32xf32> to vector<1x8x8x32xf32>
    %20 = arith.addf %17, %19 : vector<1x8x8x32xf32>
    %cst_12 = arith.constant 0.000000e+00 : f32
    %21 = vector.broadcast %cst_12 : f32 to vector<1x8x8x32xf32>
    %22 = arith.maximumf %20, %21 : vector<1x8x8x32xf32>
    %cst_13 = arith.constant dense<0xFF800000> : vector<1x8x32xf32>
    %23 = vector.multi_reduction <maximumf>, %22, %cst_13 [2] : vector<1x8x8x32xf32> to vector<1x8x32xf32>
    %24 = vector.shape_cast %23 : vector<1x8x32xf32> to vector<8x32xf32>
    %c0_14 = arith.constant 0 : index
    %c0_15 = arith.constant 0 : index
    %25 = vector.load %arg8[%c0_14, %c0_15] : memref<32x32xf32, #tpu.memory_space<vmem>>, vector<32x32xf32>
    %cst_16 = arith.constant dense<0.000000e+00> : vector<8x32xf32>
    %26 = tpu.matmul %24, %25, %cst_16 {dimension_numbers = #tpu.dot_dimension_numbers<[1], [0], [0], [1], [0, 0, 1, 1], [], []>} : vector<8x32xf32>, vector<32x32xf32>, vector<8x32xf32> -> vector<8x32xf32>
    %c0_17 = arith.constant 0 : index
    %c0_18 = arith.constant 0 : index
    %27 = vector.load %arg9[%c0_17, %c0_18] : memref<1x32xf32, #tpu.memory_space<vmem>>, vector<1x32xf32>
    %28 = vector.broadcast %27 : vector<1x32xf32> to vector<8x32xf32>
    %29 = arith.addf %26, %28 : vector<8x32xf32>
    %cst_19 = arith.constant 0.000000e+00 : f32
    %30 = vector.broadcast %cst_19 : f32 to vector<8x32xf32>
    %31 = arith.maximumf %29, %30 : vector<8x32xf32>
    %32 = vector.shape_cast %22 : vector<1x8x8x32xf32> to vector<64x32xf32>
    %33 = tpu.concatenate %32, %31 in 0 : vector<64x32xf32>, vector<8x32xf32> -> vector<72x32xf32>
    %c0_20 = arith.constant 0 : index
    %c0_21 = arith.constant 0 : index
    %34 = vector.load %arg10[%c0_20, %c0_21] : memref<32x16xf32, #tpu.memory_space<vmem>>, vector<32x16xf32>
    %cst_22 = arith.constant dense<0.000000e+00> : vector<72x16xf32>
    %35 = tpu.matmul %33, %34, %cst_22 {dimension_numbers = #tpu.dot_dimension_numbers<[1], [0], [0], [1], [0, 0, 1, 1], [], []>} : vector<72x32xf32>, vector<32x16xf32>, vector<72x16xf32> -> vector<72x16xf32>
    %36 = vector.extract_strided_slice %35 {offsets = [0, 0], sizes = [64, 16], strides = [1, 1]} : vector<72x16xf32> to vector<64x16xf32>
    %37 = vector.shape_cast %36 : vector<64x16xf32> to vector<1x8x8x16xf32>
    %38 = vector.extract_strided_slice %35 {offsets = [64, 0], sizes = [8, 16], strides = [1, 1]} : vector<72x16xf32> to vector<8x16xf32>
    %39 = vector.shape_cast %38 : vector<8x16xf32> to vector<1x8x16xf32>
    %40 = vector.shape_cast %39 : vector<1x8x16xf32> to vector<1x8x1x16xf32>
    %41 = vector.broadcast %40 : vector<1x8x1x16xf32> to vector<1x8x8x16xf32>
    %42 = arith.addf %37, %41 : vector<1x8x8x16xf32>
    %43 = vector.shape_cast %39 : vector<1x8x16xf32> to vector<1x1x8x16xf32>
    %44 = vector.broadcast %43 : vector<1x1x8x16xf32> to vector<1x8x8x16xf32>
    %45 = arith.addf %42, %44 : vector<1x8x8x16xf32>
    %c0_23 = arith.constant 0 : index
    %c0_24 = arith.constant 0 : index
    %46 = vector.load %arg11[%c0_23, %c0_24] : memref<1x16xf32, #tpu.memory_space<vmem>>, vector<1x16xf32>
    %47 = vector.shape_cast %46 : vector<1x16xf32> to vector<1x1x1x16xf32>
    %48 = vector.broadcast %47 : vector<1x1x1x16xf32> to vector<1x8x8x16xf32>
    %49 = arith.addf %45, %48 : vector<1x8x8x16xf32>
    %50 = vector.shape_cast %49 : vector<1x8x8x16xf32> to vector<1x8x128xf32>
    %c0_25 = arith.constant 0 : index
    %c0_26 = arith.constant 0 : index
    %c0_27 = arith.constant 0 : index
    %51 = vector.load %arg12[%c0_25, %c0_26, %c0_27] : memref<1x8x128xf32, #tpu.memory_space<vmem>>, vector<1x8x128xf32>
    tpu.vector_store %arg12[%c0_25, %c0_26, %c0_27], %50 {strides = array<i32>} : memref<1x8x128xf32, #tpu.memory_space<vmem>>, vector<1x8x128xf32>,
    return
  }
  func.func @transform_0(%arg0: i32, %arg1: i32) -> (i32, i32, i32) {
    %c0_i32 = arith.constant 0 : i32
    %c0_i32_0 = arith.constant 0 : i32
    %c0_i32_1 = arith.constant 0 : i32
    return %arg0, %c0_i32, %c0_i32_0 : i32, i32, i32
  }
  func.func @transform_1(%arg0: i32, %arg1: i32) -> (i32, i32, i32) {
    %c0_i32 = arith.constant 0 : i32
    %c0_i32_0 = arith.constant 0 : i32
    return %arg0, %arg1, %c0_i32 : i32, i32, i32
  }
  func.func @transform_2(%arg0: i32, %arg1: i32) -> (i32, i32) {
    %c0_i32 = arith.constant 0 : i32
    %c0_i32_0 = arith.constant 0 : i32
    %c0_i32_1 = arith.constant 0 : i32
    return %c0_i32, %c0_i32_0 : i32, i32
  }
  func.func @transform_3(%arg0: i32, %arg1: i32) -> (i32, i32) {
    %c0_i32 = arith.constant 0 : i32
    %c0_i32_0 = arith.constant 0 : i32
    %c0_i32_1 = arith.constant 0 : i32
    return %c0_i32, %c0_i32_0 : i32, i32
  }
  func.func @transform_4(%arg0: i32, %arg1: i32) -> (i32, i32) {
    %c0_i32 = arith.constant 0 : i32
    %c0_i32_0 = arith.constant 0 : i32
    %c0_i32_1 = arith.constant 0 : i32
    return %c0_i32, %c0_i32_0 : i32, i32
  }
  func.func @transform_5(%arg0: i32, %arg1: i32) -> (i32, i32) {
    %c0_i32 = arith.constant 0 : i32
    %c0_i32_0 = arith.constant 0 : i32
    %c0_i32_1 = arith.constant 0 : i32
    return %c0_i32, %c0_i32_0 : i32, i32
  }
  func.func @transform_6(%arg0: i32, %arg1: i32) -> (i32, i32) {
    %c0_i32 = arith.constant 0 : i32
    %c0_i32_0 = arith.constant 0 : i32
    %c0_i32_1 = arith.constant 0 : i32
    return %c0_i32, %c0_i32_0 : i32, i32
  }
  func.func @transform_7(%arg0: i32, %arg1: i32) -> (i32, i32) {
    %c0_i32 = arith.constant 0 : i32
    %c0_i32_0 = arith.constant 0 : i32
    %c0_i32_1 = arith.constant 0 : i32
    return %c0_i32, %c0_i32_0 : i32, i32
  }
  func.func @transform_8(%arg0: i32, %arg1: i32) -> (i32, i32) {
    %c0_i32 = arith.constant 0 : i32
    %c0_i32_0 = arith.constant 0 : i32
    %c0_i32_1 = arith.constant 0 : i32
    return %c0_i32, %c0_i32_0 : i32, i32
  }
  func.func @transform_9(%arg0: i32, %arg1: i32) -> (i32, i32) {
    %c0_i32 = arith.constant 0 : i32
    %c0_i32_0 = arith.constant 0 : i32
    %c0_i32_1 = arith.constant 0 : i32
    return %c0_i32, %c0_i32_0 : i32, i32
  }
  func.func @transform_10(%arg0: i32, %arg1: i32) -> (i32, i32, i32) {
    %c0_i32 = arith.constant 0 : i32
    %c0_i32_0 = arith.constant 0 : i32
    return %arg0, %arg1, %c0_i32 : i32, i32, i32
  }
}

</mosaic_0001>

<llo_original>
// kernel: tpu_custom_call.1
$region0: #{tpu_custom_call.1}
  #allocation0 [shape = 'u32[]', space=smem, size = 0x4, offset = 0x4, fixed_abs, tag = 'smem constant byte address 0x4 - core index']
  #allocation1 [shape = 'u32[144,128]{1,0:T(1,128)}', space=vmem, size = 0x12000, scoped, tag = 'internal scratch']
  %s0 = inlined_call_operand.hbm [shape: f32[2,8,32], index: 0, kind: input, shape index: {}]
  %s1 = inlined_call_operand.hbm [shape: f32[2,8,32], index: 1, kind: input, shape index: {}]
  %s2 = inlined_call_operand.vmem [shape: f32[32,32], index: 2, kind: input, shape index: {}]
  %s3 = inlined_call_operand.vmem [shape: f32[1,32], index: 3, kind: input, shape index: {}]
  %s4 = inlined_call_operand.hbm [shape: f32[32,32], index: 4, kind: input, shape index: {}]
  %s5 = inlined_call_operand.vmem [shape: f32[1,32], index: 5, kind: input, shape index: {}]
  %s6 = inlined_call_operand.vmem [shape: f32[32,32], index: 6, kind: input, shape index: {}]
  %s7 = inlined_call_operand.vmem [shape: f32[1,32], index: 7, kind: input, shape index: {}]
  %s8 = inlined_call_operand.vmem [shape: f32[32,16], index: 8, kind: input, shape index: {}]
  %s9 = inlined_call_operand.vmem [shape: f32[1,16], index: 9, kind: input, shape index: {}]
  %s10 = inlined_call_operand.hbm [shape: f32[2,8,128], index: 10, kind: output, shape index: {}]
  %s11 = sld [smem:[#allocation0]]
  $region85: #{tpu_custom_call.1} parent=0
    _
  %s13 = ssub.s32 1, %s11
  %s14 = scalar_select 0, %s13, %s11
  $region1: #{tpu_custom_call.1} parent=0
    #allocation2 [shape = 'u8[8192]{0}', space=vmem, size = 0x2000, scoped, tag = 'input window, operand 0']
    #allocation3 [shape = 's32[2]{0}', space=sflag, size = 0x8, scoped, tag = 'scoped memory for tpu_custom_call.1']
    #allocation4 [shape = 's32[2]{0}', space=sflag, size = 0x8, scoped, tag = 'scoped memory for tpu_custom_call.1']
    #allocation5 [shape = 'u8[8192]{0}', space=vmem, size = 0x2000, scoped, tag = 'input window, operand 1']
    #allocation6 [shape = 's32[2]{0}', space=sflag, size = 0x8, scoped, tag = 'scoped memory for tpu_custom_call.1']
    #allocation7 [shape = 'u8[16384]{0}', space=vmem, size = 0x4000, scoped, tag = 'input window, operand 4, single buffered']
    #allocation8 [shape = 'u8[8192]{0}', space=vmem, size = 0x2000, scoped, tag = 'output window, operand 0']
    %15 = vsyncpa [#allocation3], 0
    %s16 = scalar_lea.sflag [#allocation3], 1
    %17 = vsyncpa %s16, 0
    %18 = vsyncpa [#allocation6], 0
    %s19 = scalar_lea.sflag [#allocation6], 1
    %20 = vsyncpa %s19, 0
    %21 = vsyncpa [#allocation4], 0
    %s22 = scalar_lea.sflag [#allocation4], 1
    %23 = vsyncpa %s22, 0
    loop: start=0, step=1, limit=4
    $region2: #{tpu_custom_call.1} parent=1 // loop_pre_header
      _
    $region3: #{tpu_custom_call.1} parent=1 // loop_header
      %s25 = sphi 0, %s29
      %p26 = scmp.ge.s32.totalorder %s25, 4
      %s32 = sphi 0, %s44
      %s33 = sphi 0, %s40
      %s34 = sphi 0, %s32
      %s35 = sphi 0, %s33
      %s36 = sphi 0, %s34
      %s37 = sphi 0, %s35
      %s47 = sphi 0, %s49
      %s50 = sphi 0, %s47
      %s51 = sphi 0, %s50
      %s67 = sphi 0, %s51
      %s75 = sphi 0, %s77
      %s78 = sphi 0, %s75
      %s79 = sphi 0, %s78
      %s95 = sphi 0, %s79
      %s99 = sphi 0, %s99
      %s101 = sphi 0, %s99
      %s102 = sphi 0, %s101
      %s116 = sphi 0, %s102
      %s120 = sphi 0, %s120
      %s122 = sphi 0, %s120
      %s123 = sphi 0, %s122
      %s137 = sphi 0, %s123
      %s141 = sphi 0, %s141
      %s143 = sphi 0, %s141
      %s144 = sphi 0, %s143
      %s158 = sphi 0, %s144
      %s162 = sphi 0, %s162
      %s164 = sphi 0, %s162
      %s165 = sphi 0, %s164
      %s179 = sphi 0, %s165
      %s183 = sphi 0, %s183
      %s185 = sphi 0, %s183
      %s186 = sphi 0, %s185
      %s200 = sphi 0, %s186
      %s204 = sphi 0, %s204
      %s206 = sphi 0, %s204
      %s207 = sphi 0, %s206
      %s221 = sphi 0, %s207
      %s225 = sphi 0, %s225
      %s227 = sphi 0, %s225
      %s228 = sphi 0, %s227
      %s242 = sphi 0, %s228
      %s246 = sphi 0, %s246
      %s248 = sphi 0, %s246
      %s249 = sphi 0, %s248
      %s263 = sphi 0, %s249
      %s271 = sphi 0, %s273
      %s274 = sphi 0, %s271
      %s275 = sphi 0, %s274
      %s291 = sphi 0, %s275
    $region4: #{tpu_custom_call.1} parent=1 // loop_header_branch
      %28 = sbr.rel (%p26) target = $region8
    $region5: #{tpu_custom_call.1} parent=1 // loop_body
      %s30 = ssub.s32 %s25, 1
      %s31 = ssub.s32 %s25, 2
      %s38 = sadd.s32 1, %s33
      %p39 = scmp.ge.s32.totalorder %s38, 1
      %s40 = scalar_select %p39, 0, %s38
      %s41 = sadd.s32 1, %s32
      %s42 = scalar_select %p39, %s41, %s32
      %p43 = scmp.ge.s32.totalorder %s42, 2
      %s44 = scalar_select %p43, 0, %s42
      %s45 = ssub.s32 %s32, %s44
      %p46 = scmp.eq.s32.totalorder %s45, 0
      %s48 = sadd.s32 %s47, 1
      %s49 = scalar_select %p46, %s47, %s48
      %p52 = pneg %p46
      %p53 = scmp.eq.s32.totalorder %s25, 1
      %p54 = por %p52, %p53
      %p55 = scmp.ne.s32.totalorder %s47, %s50
      %p56 = scmp.eq.s32.totalorder %s25, 0
      %p57 = por %p55, %p56
      %p58 = scmp.ne.s32.totalorder %s47, %s50
      %p59 = scmp.eq.s32.totalorder %s30, 1
      %p60 = por %p58, %p59
      %p61 = scmp.ne.s32.totalorder %s50, %s51
      %p62 = scmp.eq.s32.totalorder %s30, 0
      %p63 = por %p61, %p62
      %p64 = scmp.ne.s32.totalorder %s50, %s51
      %p65 = scmp.eq.s32.totalorder %s31, 1
      %p66 = por %p64, %p65
      %p68 = scmp.ne.s32.totalorder %s51, %s67
      %p69 = scmp.eq.s32.totalorder %s31, 0
      %p70 = por %p68, %p69
      %s71 = ssub.s32 %s32, %s44
      %s72 = ssub.s32 %s33, %s40
      %s73 = sor.u32 %s71, %s72
      %p74 = scmp.eq.s32.totalorder %s73, 0
      %s76 = sadd.s32 %s75, 1
      %s77 = scalar_select %p74, %s75, %s76
      %p80 = pneg %p74
      %p81 = scmp.eq.s32.totalorder %s25, 1
      %p82 = por %p80, %p81
      %p83 = scmp.ne.s32.totalorder %s75, %s78
      %p84 = scmp.eq.s32.totalorder %s25, 0
      %p85 = por %p83, %p84
      %p86 = scmp.ne.s32.totalorder %s75, %s78
      %p87 = scmp.eq.s32.totalorder %s30, 1
      %p88 = por %p86, %p87
      %p89 = scmp.ne.s32.totalorder %s78, %s79
      %p90 = scmp.eq.s32.totalorder %s30, 0
      %p91 = por %p89, %p90
      %p92 = scmp.ne.s32.totalorder %s78, %s79
      %p93 = scmp.eq.s32.totalorder %s31, 1
      %p94 = por %p92, %p93
      %p96 = scmp.ne.s32.totalorder %s79, %s95
      %p97 = scmp.eq.s32.totalorder %s31, 0
      %p98 = por %p96, %p97
      %s100 = sadd.s32 %s99, 1
      %p103 = scmp.eq.s32.totalorder %s25, 1
      %p104 = scmp.ne.s32.totalorder %s99, %s101
      %p105 = scmp.eq.s32.totalorder %s25, 0
      %p106 = por %p104, %p105
      %p107 = scmp.ne.s32.totalorder %s99, %s101
      %p108 = scmp.eq.s32.totalorder %s30, 1
      %p109 = por %p107, %p108
      %p110 = scmp.ne.s32.totalorder %s101, %s102
      %p111 = scmp.eq.s32.totalorder %s30, 0
      %p112 = por %p110, %p111
      %p113 = scmp.ne.s32.totalorder %s101, %s102
      %p114 = scmp.eq.s32.totalorder %s31, 1
      %p115 = por %p113, %p114
      %p117 = scmp.ne.s32.totalorder %s102, %s116
      %p118 = scmp.eq.s32.totalorder %s31, 0
      %p119 = por %p117, %p118
      %s121 = sadd.s32 %s120, 1
      %p124 = scmp.eq.s32.totalorder %s25, 1
      %p125 = scmp.ne.s32.totalorder %s120, %s122
      %p126 = scmp.eq.s32.totalorder %s25, 0
      %p127 = por %p125, %p126
      %p128 = scmp.ne.s32.totalorder %s120, %s122
      %p129 = scmp.eq.s32.totalorder %s30, 1
      %p130 = por %p128, %p129
      %p131 = scmp.ne.s32.totalorder %s122, %s123
      %p132 = scmp.eq.s32.totalorder %s30, 0
      %p133 = por %p131, %p132
      %p134 = scmp.ne.s32.totalorder %s122, %s123
      %p135 = scmp.eq.s32.totalorder %s31, 1
      %p136 = por %p134, %p135
      %p138 = scmp.ne.s32.totalorder %s123, %s137
      %p139 = scmp.eq.s32.totalorder %s31, 0
      %p140 = por %p138, %p139
      %s142 = sadd.s32 %s141, 1
      %p145 = scmp.eq.s32.totalorder %s25, 1
      %p146 = scmp.ne.s32.totalorder %s141, %s143
      %p147 = scmp.eq.s32.totalorder %s25, 0
      %p148 = por %p146, %p147
      %p149 = scmp.ne.s32.totalorder %s141, %s143
      %p150 = scmp.eq.s32.totalorder %s30, 1
      %p151 = por %p149, %p150
      %p152 = scmp.ne.s32.totalorder %s143, %s144
      %p153 = scmp.eq.s32.totalorder %s30, 0
      %p154 = por %p152, %p153
      %p155 = scmp.ne.s32.totalorder %s143, %s144
      %p156 = scmp.eq.s32.totalorder %s31, 1
      %p157 = por %p155, %p156
      %p159 = scmp.ne.s32.totalorder %s144, %s158
      %p160 = scmp.eq.s32.totalorder %s31, 0
      %p161 = por %p159, %p160
      %s163 = sadd.s32 %s162, 1
      %p166 = scmp.eq.s32.totalorder %s25, 1
      %p167 = scmp.ne.s32.totalorder %s162, %s164
      %p168 = scmp.eq.s32.totalorder %s25, 0
      %p169 = por %p167, %p168
      %p170 = scmp.ne.s32.totalorder %s162, %s164
      %p171 = scmp.eq.s32.totalorder %s30, 1
      %p172 = por %p170, %p171
      %p173 = scmp.ne.s32.totalorder %s164, %s165
      %p174 = scmp.eq.s32.totalorder %s30, 0
      %p175 = por %p173, %p174
      %p176 = scmp.ne.s32.totalorder %s164, %s165
      %p177 = scmp.eq.s32.totalorder %s31, 1
      %p178 = por %p176, %p177
      %p180 = scmp.ne.s32.totalorder %s165, %s179
      %p181 = scmp.eq.s32.totalorder %s31, 0
      %p182 = por %p180, %p181
      %s184 = sadd.s32 %s183, 1
      %p187 = scmp.eq.s32.totalorder %s25, 1
      %p188 = scmp.ne.s32.totalorder %s183, %s185
      %p189 = scmp.eq.s32.totalorder %s25, 0
      %p190 = por %p188, %p189
      %p191 = scmp.ne.s32.totalorder %s183, %s185
      %p192 = scmp.eq.s32.totalorder %s30, 1
      %p193 = por %p191, %p192
      %p194 = scmp.ne.s32.totalorder %s185, %s186
      %p195 = scmp.eq.s32.totalorder %s30, 0
      %p196 = por %p194, %p195
      %p197 = scmp.ne.s32.totalorder %s185, %s186
      %p198 = scmp.eq.s32.totalorder %s31, 1
      %p199 = por %p197, %p198
      %p201 = scmp.ne.s32.totalorder %s186, %s200
      %p202 = scmp.eq.s32.totalorder %s31, 0
      %p203 = por %p201, %p202
      %s205 = sadd.s32 %s204, 1
      %p208 = scmp.eq.s32.totalorder %s25, 1
      %p209 = scmp.ne.s32.totalorder %s204, %s206
      %p210 = scmp.eq.s32.totalorder %s25, 0
      %p211 = por %p209, %p210
      %p212 = scmp.ne.s32.totalorder %s204, %s206
      %p213 = scmp.eq.s32.totalorder %s30, 1
      %p214 = por %p212, %p213
      %p215 = scmp.ne.s32.totalorder %s206, %s207
      %p216 = scmp.eq.s32.totalorder %s30, 0
      %p217 = por %p215, %p216
      %p218 = scmp.ne.s32.totalorder %s206, %s207
      %p219 = scmp.eq.s32.totalorder %s31, 1
      %p220 = por %p218, %p219
      %p222 = scmp.ne.s32.totalorder %s207, %s221
      %p223 = scmp.eq.s32.totalorder %s31, 0
      %p224 = por %p222, %p223
      %s226 = sadd.s32 %s225, 1
      %p229 = scmp.eq.s32.totalorder %s25, 1
      %p230 = scmp.ne.s32.totalorder %s225, %s227
      %p231 = scmp.eq.s32.totalorder %s25, 0
      %p232 = por %p230, %p231
      %p233 = scmp.ne.s32.totalorder %s225, %s227
      %p234 = scmp.eq.s32.totalorder %s30, 1
      %p235 = por %p233, %p234
      %p236 = scmp.ne.s32.totalorder %s227, %s228
      %p237 = scmp.eq.s32.totalorder %s30, 0
      %p238 = por %p236, %p237
      %p239 = scmp.ne.s32.totalorder %s227, %s228
      %p240 = scmp.eq.s32.totalorder %s31, 1
      %p241 = por %p239, %p240
      %p243 = scmp.ne.s32.totalorder %s228, %s242
      %p244 = scmp.eq.s32.totalorder %s31, 0
      %p245 = por %p243, %p244
      %s247 = sadd.s32 %s246, 1
      %p250 = scmp.eq.s32.totalorder %s25, 1
      %p251 = scmp.ne.s32.totalorder %s246, %s248
      %p252 = scmp.eq.s32.totalorder %s25, 0
      %p253 = por %p251, %p252
      %p254 = scmp.ne.s32.totalorder %s246, %s248
      %p255 = scmp.eq.s32.totalorder %s30, 1
      %p256 = por %p254, %p255
      %p257 = scmp.ne.s32.totalorder %s248, %s249
      %p258 = scmp.eq.s32.totalorder %s30, 0
      %p259 = por %p257, %p258
      %p260 = scmp.ne.s32.totalorder %s248, %s249
      %p261 = scmp.eq.s32.totalorder %s31, 1
      %p262 = por %p260, %p261
      %p264 = scmp.ne.s32.totalorder %s249, %s263
      %p265 = scmp.eq.s32.totalorder %s31, 0
      %p266 = por %p264, %p265
      %s267 = ssub.s32 %s32, %s44
      %s268 = ssub.s32 %s33, %s40
      %s269 = sor.u32 %s267, %s268
      %p270 = scmp.eq.s32.totalorder %s269, 0
      %s272 = sadd.s32 %s271, 1
      %s273 = scalar_select %p270, %s271, %s272
      %p276 = pneg %p270
      %p277 = scmp.eq.s32.totalorder %s25, 1
      %p278 = por %p276, %p277
      %p279 = scmp.ne.s32.totalorder %s271, %s274
      %p280 = scmp.eq.s32.totalorder %s25, 0
      %p281 = por %p279, %p280
      %p282 = scmp.ne.s32.totalorder %s271, %s274
      %p283 = scmp.eq.s32.totalorder %s30, 1
      %p284 = por %p282, %p283
      %p285 = scmp.ne.s32.totalorder %s274, %s275
      %p286 = scmp.eq.s32.totalorder %s30, 0
      %p287 = por %p285, %p286
      %p288 = scmp.ne.s32.totalorder %s274, %s275
      %p289 = scmp.eq.s32.totalorder %s31, 1
      %p290 = por %p288, %p289
      %p292 = scmp.ne.s32.totalorder %s275, %s291
      %p293 = scmp.eq.s32.totalorder %s31, 0
      %p294 = por %p292, %p293
      %p295 = scmp.le.s32.totalorder 1, %s25
      %p296 = scmp.lt.s32.totalorder %s25, 3
      %p297 = pnand %p295, %p296
      %p298 = pneg %p297
      // Predicated region
      $region9: #{tpu_custom_call.1} parent=5 // pred_check
        _
      $region10: #{tpu_custom_call.1} parent=5 // pred_check_branch
        %300 = sbr.rel (%p297) target = $region12
      $region11: #{tpu_custom_call.1} parent=5 // pred_region
        %s301 = ssub.s32 %s25, 1
        // Predicated region
        $region13: #{tpu_custom_call.1} parent=11 // pred_check
          %p302 = pneg %p112
        $region14: #{tpu_custom_call.1} parent=11 // pred_check_branch
          %304 = sbr.rel (%p302) target = $region16
        $region15: #{tpu_custom_call.1} parent=11 // pred_region
          _
        $region16: #{tpu_custom_call.1} parent=11 // pred_fallthru
          _
        // Predicated region
        $region17: #{tpu_custom_call.1} parent=11 // pred_check
          %p305 = pneg %p133
        $region18: #{tpu_custom_call.1} parent=11 // pred_check_branch
          %307 = sbr.rel (%p305) target = $region20
        $region19: #{tpu_custom_call.1} parent=11 // pred_region
          _
        $region20: #{tpu_custom_call.1} parent=11 // pred_fallthru
          _
        // Predicated region
        $region21: #{tpu_custom_call.1} parent=11 // pred_check
          %p308 = pneg %p154
        $region22: #{tpu_custom_call.1} parent=11 // pred_check_branch
          %310 = sbr.rel (%p308) target = $region24
        $region23: #{tpu_custom_call.1} parent=11 // pred_region
          %s312 = ssub.s32 512, 512
          %313 = vsyncadd [#allocation6], %s312
          %s314 = sshll.u32 [#allocation7], 4
          %s315 = int_to_ptr.vmem [resolvable:$true] %s314
          %320 = dma.hbm_to_vmem [thread:$0]  %s4, 512, %s315, [#allocation6], 128, 128, 8
        $region24: #{tpu_custom_call.1} parent=11 // pred_fallthru
          _
        // Predicated region
        $region25: #{tpu_custom_call.1} parent=11 // pred_check
          %p321 = pneg %p175
        $region26: #{tpu_custom_call.1} parent=11 // pred_check_branch
          %323 = sbr.rel (%p321) target = $region28
        $region27: #{tpu_custom_call.1} parent=11 // pred_region
          _
        $region28: #{tpu_custom_call.1} parent=11 // pred_fallthru
          _
        // Predicated region
        $region29: #{tpu_custom_call.1} parent=11 // pred_check
          %p324 = pneg %p196
        $region30: #{tpu_custom_call.1} parent=11 // pred_check_branch
          %326 = sbr.rel (%p324) target = $region32
        $region31: #{tpu_custom_call.1} parent=11 // pred_region
          _
        $region32: #{tpu_custom_call.1} parent=11 // pred_fallthru
          _
        // Predicated region
        $region33: #{tpu_custom_call.1} parent=11 // pred_check
          %p327 = pneg %p217
        $region34: #{tpu_custom_call.1} parent=11 // pred_check_branch
          %329 = sbr.rel (%p327) target = $region36
        $region35: #{tpu_custom_call.1} parent=11 // pred_region
          _
        $region36: #{tpu_custom_call.1} parent=11 // pred_fallthru
          _
        // Predicated region
        $region37: #{tpu_custom_call.1} parent=11 // pred_check
          %p330 = pneg %p238
        $region38: #{tpu_custom_call.1} parent=11 // pred_check_branch
          %332 = sbr.rel (%p330) target = $region40
        $region39: #{tpu_custom_call.1} parent=11 // pred_region
          _
        $region40: #{tpu_custom_call.1} parent=11 // pred_fallthru
          _
        // Predicated region
        $region41: #{tpu_custom_call.1} parent=11 // pred_check
          %p333 = pneg %p259
        $region42: #{tpu_custom_call.1} parent=11 // pred_check_branch
          %335 = sbr.rel (%p333) target = $region44
        $region43: #{tpu_custom_call.1} parent=11 // pred_region
          _
        $region44: #{tpu_custom_call.1} parent=11 // pred_fallthru
          _
      $region12: #{tpu_custom_call.1} parent=5 // pred_fallthru
        _
      %p336 = scmp.lt.s32.totalorder %s25, 2
      // Predicated region
      $region45: #{tpu_custom_call.1} parent=5 // pred_check
        %p337 = pneg %p336
      $region46: #{tpu_custom_call.1} parent=5 // pred_check_branch
        %339 = sbr.rel (%p337) target = $region48
      $region47: #{tpu_custom_call.1} parent=5 // pred_region
        // Predicated region
        $region49: #{tpu_custom_call.1} parent=47 // pred_check
          %p340 = pneg %p57
        $region50: #{tpu_custom_call.1} parent=47 // pred_check_branch
          %342 = sbr.rel (%p340) target = $region52
        $region51: #{tpu_custom_call.1} parent=47 // pred_region
          %s343 = sand.u32 %s47, 1
          %s344 = scalar_lea.sflag [#allocation3], %s343
          %s345 = sand.u32 %s47, 1
          %s346 = smul.addr %s345, 8
          %s347 = scalar_lea.vmem [#allocation2], %s346
          %s349 = ssub.s32 128, 128
          %350 = vsyncadd %s344, %s349
          %s351 = smul.addr %s32, 128
          %s352 = scalar_lea.hbm %s0, %s351
          %s354 = sshll.u32 %s347, 4
          %s355 = int_to_ptr.vmem [resolvable:$true] %s354
          %357 = dma.hbm_to_vmem [thread:$0]  %s352, 128, %s355, %s344
        $region52: #{tpu_custom_call.1} parent=47 // pred_fallthru
          _
        // Predicated region
        $region53: #{tpu_custom_call.1} parent=47 // pred_check
          %p358 = pneg %p85
        $region54: #{tpu_custom_call.1} parent=47 // pred_check_branch
          %360 = sbr.rel (%p358) target = $region56
        $region55: #{tpu_custom_call.1} parent=47 // pred_region
          %s361 = sand.u32 %s25, 1
          %s362 = scalar_lea.sflag [#allocation6], %s361
          %s363 = sand.u32 %s75, 1
          %s364 = smul.addr %s363, 8
          %s365 = scalar_lea.vmem [#allocation5], %s364
          %s367 = ssub.s32 128, 128
          %368 = vsyncadd %s362, %s367
          %s369 = sadd.s32 %s33, %s32
          %s370 = smul.addr %s369, 128
          %s371 = scalar_lea.hbm %s1, %s370
          %s373 = sshll.u32 %s365, 4
          %s374 = int_to_ptr.vmem [resolvable:$true] %s373
          %376 = dma.hbm_to_vmem [thread:$0]  %s371, 128, %s374, %s362
        $region56: #{tpu_custom_call.1} parent=47 // pred_fallthru
          _
      $region48: #{tpu_custom_call.1} parent=5 // pred_fallthru
        _
      %p377 = scmp.le.s32.totalorder 1, %s25
      %p378 = scmp.lt.s32.totalorder %s25, 3
      %p379 = pnand %p377, %p378
      %p380 = pneg %p379
      // Predicated region
      $region57: #{tpu_custom_call.1} parent=5 // pred_check
        _
      $region58: #{tpu_custom_call.1} parent=5 // pred_check_branch
        %382 = sbr.rel (%p379) target = $region60
      $region59: #{tpu_custom_call.1} parent=5 // pred_region
        %s383 = ssub.s32 %s25, 1
        %s384 = sand.u32 %s50, 1
        %s385 = scalar_lea.sflag [#allocation3], %s384
        %s386 = sand.u32 %s50, 1
        %s387 = smul.addr %s386, 8
        %s388 = scalar_lea.vmem [#allocation2], %s387
        // Predicated region
        $region61: #{tpu_custom_call.1} parent=59 // pred_check
          %p389 = pneg %p63
        $region62: #{tpu_custom_call.1} parent=59 // pred_check_branch
          %391 = sbr.rel (%p389) target = $region64
        $region63: #{tpu_custom_call.1} parent=59 // pred_region
          %392 = dma.done %s385, 128
        $region64: #{tpu_custom_call.1} parent=59 // pred_fallthru
          _
        %s393 = sand.u32 %s30, 1
        %s394 = scalar_lea.sflag [#allocation6], %s393
        %s395 = sand.u32 %s78, 1
        %s396 = smul.addr %s395, 8
        %s397 = scalar_lea.vmem [#allocation5], %s396
        // Predicated region
        $region65: #{tpu_custom_call.1} parent=59 // pred_check
          %p398 = pneg %p91
        $region66: #{tpu_custom_call.1} parent=59 // pred_check_branch
          %400 = sbr.rel (%p398) target = $region68
        $region67: #{tpu_custom_call.1} parent=59 // pred_region
          %401 = dma.done %s394, 128
        $region68: #{tpu_custom_call.1} parent=59 // pred_fallthru
          _
        // Predicated region
        $region69: #{tpu_custom_call.1} parent=59 // pred_check
          %p402 = pneg %p154
        $region70: #{tpu_custom_call.1} parent=59 // pred_check_branch
          %404 = sbr.rel (%p402) target = $region72
        $region71: #{tpu_custom_call.1} parent=59 // pred_region
          %405 = dma.done [#allocation6], 512
        $region72: #{tpu_custom_call.1} parent=59 // pred_fallthru
          _
        %s406 = sand.u32 %s50, 1
        %s407 = scalar_lea.sflag [#allocation3], %s406
        %s408 = sand.u32 %s50, 1
        %s409 = smul.addr %s408, 8
        %s410 = scalar_lea.vmem [#allocation2], %s409
        %p411 = pneg %p63
        %p412 = pneg %p60
        %s413 = sand.u32 %s30, 1
        %s414 = scalar_lea.sflag [#allocation6], %s413
        %s415 = sand.u32 %s78, 1
        %s416 = smul.addr %s415, 8
        %s417 = scalar_lea.vmem [#allocation5], %s416
        %p418 = pneg %p91
        %p419 = pneg %p88
        %p420 = pneg %p112
        %p421 = pneg %p109
        %p422 = pneg %p133
        %p423 = pneg %p130
        %p424 = pneg %p154
        %p425 = pneg %p151
        %p426 = pneg %p175
        %p427 = pneg %p172
        %p428 = pneg %p196
        %p429 = pneg %p193
        %p430 = pneg %p217
        %p431 = pneg %p214
        %p432 = pneg %p238
        %p433 = pneg %p235
        %p434 = pneg %p259
        %p435 = pneg %p256
        %p436 = pneg %p287
        %p437 = pneg %p284
        %s438 = sand.u32 %s274, 1
        %s439 = scalar_lea.sflag [#allocation4], %s438
        %s440 = sand.u32 %s274, 1
        %s441 = smul.addr %s440, 8
        %s442 = scalar_lea.vmem [#allocation8], %s441
        %v443 = vld [vmem:[%s388] sm:$0xff]
        %v444 = vld [vmem:[%s2] sm:$0xff]
        %v445 = vld [vmem:[%s2 + $0x8] sm:$0xff]
        %v446 = vld [vmem:[%s2 + $0x10] sm:$0xff]
        %v447 = vld [vmem:[%s2 + $0x18] sm:$0xff]
        %v448 = vld [vmem:[%s3] sm:$0x1]
        %v450 = vlaneseq
        %v451 = vshrl.u32 %v450, 7
        %v452 = vsub.s32 0, %v451
        %v453 = vrot.slane %v448, %v452
        %vm455 = vcmask 261120
        %v457 = vsel %vm455, %v443, 0
        %459 = vmatprep.subr.mxu0 0.0
        %460 = vmatpush1.msra.mxu0 %v444
        %461 = vmatprep.subr.mxu0 0.0
        %462 = vmatpush1.msra.mxu0 %v445
        %463 = vmatprep.subr.mxu0 0.0
        %464 = vmatpush1.msra.mxu0 %v446
        %465 = vmatprep.subr.mxu0 0.0
        %466 = vmatpush1.msra.mxu0 %v447
        %467 = vmatprep.subr.mxu0 0.0
        %468 = vmatpush1.msra.mxu0 0.0
        %469 = vmatprep.subr.mxu0 0.0
        %470 = vmatpush1.msra.mxu0 0.0
        %471 = vmatprep.subr.mxu0 0.0
        %472 = vmatpush1.msra.mxu0 0.0
        %473 = vmatprep.subr.mxu0 0.0
        %474 = vmatpush1.msra.mxu0 0.0
        %475 = vmatprep.subr.mxu0 0.0
        %476 = vmatpush1.msra.mxu0 0.0
        %477 = vmatprep.subr.mxu0 0.0
        %478 = vmatpush1.msra.mxu0 0.0
        %479 = vmatprep.subr.mxu0 0.0
        %480 = vmatpush1.msra.mxu0 0.0
        %481 = vmatprep.subr.mxu0 0.0
        %482 = vmatpush1.msra.mxu0 0.0
        %483 = vmatprep.subr.mxu0 0.0
        %484 = vmatpush1.msra.mxu0 0.0
        %485 = vmatprep.subr.mxu0 0.0
        %486 = vmatpush1.msra.mxu0 0.0
        %487 = vmatprep.subr.mxu0 0.0
        %488 = vmatpush1.msra.mxu0 0.0
        %489 = vmatprep.subr.mxu0 0.0
        %490 = vmatpush1.msra.mxu0 0.0
        %491 = vmatprep.subr.mxu0 0.0
        %492 = vmatpush1.msra.mxu0 0.0
        %493 = vmatprep.subr.mxu0 0.0
        %494 = vmatpush1.msra.mxu0 0.0
        %495 = vmatprep.subr.mxu0 0.0
        %496 = vmatpush1.msra.mxu0 0.0
        %497 = vmatprep.subr.mxu0 0.0
        %498 = vmatpush1.msra.mxu0 0.0
        %499 = vmatprep.subr.mxu0 0.0
        %500 = vmatpush1.msra.mxu0 0.0
        %501 = vmatprep.subr.mxu0 0.0
        %502 = vmatpush1.msra.mxu0 0.0
        %503 = vmatprep.subr.mxu0 0.0
        %504 = vmatpush1.msra.mxu0 0.0
        %505 = vmatprep.subr.mxu0 0.0
        %506 = vmatpush1.msra.mxu0 0.0
        %507 = vmatprep.subr.mxu0 0.0
        %508 = vmatpush1.msra.mxu0 0.0
        %509 = vmatprep.subr.mxu0 0.0
        %510 = vmatpush1.msra.mxu0 0.0
        %511 = vmatprep.subr.mxu0 0.0
        %512 = vmatpush1.msra.mxu0 0.0
        %513 = vmatprep.subr.mxu0 0.0
        %514 = vmatpush1.msra.mxu0 0.0
        %515 = vmatprep.subr.mxu0 0.0
        %516 = vmatpush1.msra.mxu0 0.0
        %517 = vmatprep.subr.mxu0 0.0
        %518 = vmatpush1.msra.mxu0 0.0
        %519 = vmatprep.subr.mxu0 0.0
        %520 = vmatpush1.msra.mxu0 0.0
        %521 = vmatprep.subr.mxu0 0.0
        %522 = vmatpush1.msra.mxu0 0.0
        %523 = vmatprep.mubr.f32.mxu0 0.0
        %524 = vmatmul.mubr.f32.gmra.mrb[0].mxu0 %v457
        %v525 = vpop.f32.mrb[0].mxu0
        %v526 = vadd.f32 %v453, %v525
        %v527 = vpop.f32.mrb[0].mxu0
        %528 = vdwg.mxu0
        %v529 = vmax.f32 %v526, 0.0
        %v530 = vld [vmem:[#allocation7] sm:$0xff]
        %v531 = vld [vmem:[#allocation7 + $0x8] sm:$0xff]
        %v532 = vld [vmem:[#allocation7 + $0x10] sm:$0xff]
        %v533 = vld [vmem:[#allocation7 + $0x18] sm:$0xff]
        %v535 = vsel %vm455, %v529, 0
        %537 = vmatprep.subr.mxu0 0.0
        %538 = vmatpush1.msra.mxu0 %v530
        %539 = vmatprep.subr.mxu0 0.0
        %540 = vmatpush1.msra.mxu0 %v531
        %541 = vmatprep.subr.mxu0 0.0
        %542 = vmatpush1.msra.mxu0 %v532
        %543 = vmatprep.subr.mxu0 0.0
        %544 = vmatpush1.msra.mxu0 %v533
        %545 = vmatprep.subr.mxu0 0.0
        %546 = vmatpush1.msra.mxu0 0.0
        %547 = vmatprep.subr.mxu0 0.0
        %548 = vmatpush1.msra.mxu0 0.0
        %549 = vmatprep.subr.mxu0 0.0
        %550 = vmatpush1.msra.mxu0 0.0
        %551 = vmatprep.subr.mxu0 0.0
        %552 = vmatpush1.msra.mxu0 0.0
        %553 = vmatprep.subr.mxu0 0.0
        %554 = vmatpush1.msra.mxu0 0.0
        %555 = vmatprep.subr.mxu0 0.0
        %556 = vmatpush1.msra.mxu0 0.0
        %557 = vmatprep.subr.mxu0 0.0
        %558 = vmatpush1.msra.mxu0 0.0
        %559 = vmatprep.subr.mxu0 0.0
        %560 = vmatpush1.msra.mxu0 0.0
        %561 = vmatprep.subr.mxu0 0.0
        %562 = vmatpush1.msra.mxu0 0.0
        %563 = vmatprep.subr.mxu0 0.0
        %564 = vmatpush1.msra.mxu0 0.0
        %565 = vmatprep.subr.mxu0 0.0
        %566 = vmatpush1.msra.mxu0 0.0
        %567 = vmatprep.subr.mxu0 0.0
        %568 = vmatpush1.msra.mxu0 0.0
        %569 = vmatprep.subr.mxu0 0.0
        %570 = vmatpush1.msra.mxu0 0.0
        %571 = vmatprep.subr.mxu0 0.0
        %572 = vmatpush1.msra.mxu0 0.0
        %573 = vmatprep.subr.mxu0 0.0
        %574 = vmatpush1.msra.mxu0 0.0
        %575 = vmatprep.subr.mxu0 0.0
        %576 = vmatpush1.msra.mxu0 0.0
        %577 = vmatprep.subr.mxu0 0.0
        %578 = vmatpush1.msra.mxu0 0.0
        %579 = vmatprep.subr.mxu0 0.0
        %580 = vmatpush1.msra.mxu0 0.0
        %581 = vmatprep.subr.mxu0 0.0
        %582 = vmatpush1.msra.mxu0 0.0
        %583 = vmatprep.subr.mxu0 0.0
        %584 = vmatpush1.msra.mxu0 0.0
        %585 = vmatprep.subr.mxu0 0.0
        %586 = vmatpush1.msra.mxu0 0.0
        %587 = vmatprep.subr.mxu0 0.0
        %588 = vmatpush1.msra.mxu0 0.0
        %589 = vmatprep.subr.mxu0 0.0
        %590 = vmatpush1.msra.mxu0 0.0
        %591 = vmatprep.subr.mxu0 0.0
        %592 = vmatpush1.msra.mxu0 0.0
        %593 = vmatprep.subr.mxu0 0.0
        %594 = vmatpush1.msra.mxu0 0.0
        %595 = vmatprep.subr.mxu0 0.0
        %596 = vmatpush1.msra.mxu0 0.0
        %597 = vmatprep.subr.mxu0 0.0
        %598 = vmatpush1.msra.mxu0 0.0
        %599 = vmatprep.subr.mxu0 0.0
        %600 = vmatpush1.msra.mxu0 0.0
        %601 = vmatprep.mubr.f32.mxu0 0.0
        %602 = vmatmul.mubr.f32.gmra.mrb[0].mxu0 %v535
        %v603 = vpop.f32.mrb[0].mxu0
        %v604 = vadd.f32 0.0, %v603
        %v605 = vpop.f32.mrb[0].mxu0
        %606 = vdwg.mxu0
        %v607 = vld [vmem:[%s5] sm:$0x1]
        %v609 = vcombine.high %v604, %v604
        %v611 = vunpack.c.l.s4 1966171168
        %v612 = vunpack.c.0.s8 %v611
        %v613 = vlaneseq
        %v614 = vshrl.u32 %v613, 7
        %v615 = vsub.s32 %v612, %v614
        %v616 = vrot.slane %v604, %v615
        %v618 = vunpack.c.l.s4 1966171168
        %v619 = vunpack.c.0.s8 %v618
        %v620 = vlaneseq
        %v621 = vshrl.u32 %v620, 7
        %v622 = vsub.s32 %v619, %v621
        %v623 = vrot.slane %v609, %v622
        %v624 = vcombine.high %v616, %v616
        %v625 = vcombine.high %v623, %v623
        %v627 = vunpack.c.l.s4 1966171168
        %v628 = vunpack.c.0.s8 %v627
        %v629 = vlaneseq
        %v630 = vshrl.u32 %v629, 7
        %v631 = vsub.s32 %v628, %v630
        %v632 = vrot.slane %v616, %v631
        %v634 = vunpack.c.l.s4 1966171168
        %v635 = vunpack.c.0.s8 %v634
        %v636 = vlaneseq
        %v637 = vshrl.u32 %v636, 7
        %v638 = vsub.s32 %v635, %v637
        %v639 = vrot.slane %v623, %v638
        %v641 = vunpack.c.l.s4 1966171168
        %v642 = vunpack.c.0.s8 %v641
        %v643 = vlaneseq
        %v644 = vshrl.u32 %v643, 7
        %v645 = vsub.s32 %v642, %v644
        %v646 = vrot.slane %v624, %v645
        %v648 = vunpack.c.l.s4 1966171168
        %v649 = vunpack.c.0.s8 %v648
        %v650 = vlaneseq
        %v651 = vshrl.u32 %v650, 7
        %v652 = vsub.s32 %v649, %v651
        %v653 = vrot.slane %v625, %v652
        %v654 = vcombine.high %v632, %v632
        %v655 = vcombine.high %v639, %v639
        %v656 = vcombine.high %v646, %v646
        %v657 = vcombine.high %v653, %v653
        %v658 = vlaneseq
        %v659 = vshrl.u32 %v658, 7
        %v660 = vsub.s32 0, %v659
        %v661 = vrot.slane %v632, %v660
        %v662 = vlaneseq
        %v663 = vshrl.u32 %v662, 7
        %v664 = vsub.s32 0, %v663
        %v665 = vrot.slane %v646, %v664
        %v666 = vlaneseq
        %v667 = vshrl.u32 %v666, 7
        %v668 = vsub.s32 0, %v667
        %v669 = vrot.slane %v654, %v668
        %v670 = vlaneseq
        %v671 = vshrl.u32 %v670, 7
        %v672 = vsub.s32 0, %v671
        %v673 = vrot.slane %v656, %v672
        %v674 = vlaneseq
        %v675 = vshrl.u32 %v674, 7
        %v676 = vsub.s32 0, %v675
        %v677 = vrot.slane %v639, %v676
        %v678 = vlaneseq
        %v679 = vshrl.u32 %v678, 7
        %v680 = vsub.s32 0, %v679
        %v681 = vrot.slane %v653, %v680
        %v682 = vlaneseq
        %v683 = vshrl.u32 %v682, 7
        %v684 = vsub.s32 0, %v683
        %v685 = vrot.slane %v655, %v684
        %v686 = vlaneseq
        %v687 = vshrl.u32 %v686, 7
        %v688 = vsub.s32 0, %v687
        %v689 = vrot.slane %v657, %v688
        %v698 = vadd.f32 %v661, %v604
        %v699 = vadd.f32 %v665, %v604
        %v700 = vadd.f32 %v669, %v604
        %v701 = vadd.f32 %v673, %v604
        %v702 = vadd.f32 %v677, %v604
        %v703 = vadd.f32 %v681, %v604
        %v704 = vadd.f32 %v685, %v604
        %v705 = vadd.f32 %v689, %v604
        %v707 = vlaneseq
        %v708 = vshrl.u32 %v707, 7
        %v709 = vsub.s32 0, %v708
        %v710 = vrot.slane %v607, %v709
        %v712 = vadd.f32 %v698, %v710
        %v713 = vadd.f32 %v699, %v710
        %v714 = vadd.f32 %v700, %v710
        %v715 = vadd.f32 %v701, %v710
        %v716 = vadd.f32 %v702, %v710
        %v717 = vadd.f32 %v703, %v710
        %v718 = vadd.f32 %v704, %v710
        %v719 = vadd.f32 %v705, %v710
        %v720 = vmax.f32 %v712, 0.0
        %v721 = vmax.f32 %v713, 0.0
        %v722 = vmax.f32 %v714, 0.0
        %v723 = vmax.f32 %v715, 0.0
        %v724 = vmax.f32 %v716, 0.0
        %v725 = vmax.f32 %v717, 0.0
        %v726 = vmax.f32 %v718, 0.0
        %v727 = vmax.f32 %v719, 0.0
        %v728 = vsel %vm455, %v720, -inf
        %v729 = vrot.slane %v728, 4
        %v730 = vmax.f32 %v728, %v729
        %v731 = vrot.slane %v730, 2
        %v732 = vmax.f32 %v730, %v731
        %v733 = vrot.slane %v732, 1
        %v734 = vmax.f32 %v732, %v733
        %v735 = vsel %vm455, %v721, -inf
        %v736 = vrot.slane %v735, 4
        %v737 = vmax.f32 %v735, %v736
        %v738 = vrot.slane %v737, 2
        %v739 = vmax.f32 %v737, %v738
        %v740 = vrot.slane %v739, 1
        %v741 = vmax.f32 %v739, %v740
        %v742 = vsel %vm455, %v722, -inf
        %v743 = vrot.slane %v742, 4
        %v744 = vmax.f32 %v742, %v743
        %v745 = vrot.slane %v744, 2
        %v746 = vmax.f32 %v744, %v745
        %v747 = vrot.slane %v746, 1
        %v748 = vmax.f32 %v746, %v747
        %v749 = vsel %vm455, %v723, -inf
        %v750 = vrot.slane %v749, 4
        %v751 = vmax.f32 %v749, %v750
        %v752 = vrot.slane %v751, 2
        %v753 = vmax.f32 %v751, %v752
        %v754 = vrot.slane %v753, 1
        %v755 = vmax.f32 %v753, %v754
        %v756 = vsel %vm455, %v724, -inf
        %v757 = vrot.slane %v756, 4
        %v758 = vmax.f32 %v756, %v757
        %v759 = vrot.slane %v758, 2
        %v760 = vmax.f32 %v758, %v759
        %v761 = vrot.slane %v760, 1
        %v762 = vmax.f32 %v760, %v761
        %v763 = vsel %vm455, %v725, -inf
        %v764 = vrot.slane %v763, 4
        %v765 = vmax.f32 %v763, %v764
        %v766 = vrot.slane %v765, 2
        %v767 = vmax.f32 %v765, %v766
        %v768 = vrot.slane %v767, 1
        %v769 = vmax.f32 %v767, %v768
        %v770 = vsel %vm455, %v726, -inf
        %v771 = vrot.slane %v770, 4
        %v772 = vmax.f32 %v770, %v771
        %v773 = vrot.slane %v772, 2
        %v774 = vmax.f32 %v772, %v773
        %v775 = vrot.slane %v774, 1
        %v776 = vmax.f32 %v774, %v775
        %v777 = vsel %vm455, %v727, -inf
        %v778 = vrot.slane %v777, 4
        %v779 = vmax.f32 %v777, %v778
        %v780 = vrot.slane %v779, 2
        %v781 = vmax.f32 %v779, %v780
        %v782 = vrot.slane %v781, 1
        %v783 = vmax.f32 %v781, %v782
        %v784 = vld [vmem:[%s6] sm:$0xff]
        %v785 = vld [vmem:[%s6 + $0x8] sm:$0xff]
        %v786 = vld [vmem:[%s6 + $0x10] sm:$0xff]
        %v787 = vld [vmem:[%s6 + $0x18] sm:$0xff]
        %v788 = vld [vmem:[%s7] sm:$0x1]
        %v790 = vlaneseq
        %v791 = vshrl.u32 %v790, 7
        %v792 = vsub.s32 0, %v791
        %v793 = vrot.slane %v788, %v792
        %vm803 = vcmask 1041409
        %v804 = vsel %vm803, %v741, %v734
        %vm805 = vcmask 1042434
        %v806 = vsel %vm805, %v748, %v804
        %vm807 = vcmask 1043459
        %v808 = vsel %vm807, %v755, %v806
        %vm809 = vcmask 1044484
        %v810 = vsel %vm809, %v762, %v808
        %vm811 = vcmask 1045509
        %v812 = vsel %vm811, %v769, %v810
        %vm813 = vcmask 1046534
        %v814 = vsel %vm813, %v776, %v812
        %vm815 = vcmask 1047559
        %v816 = vsel %vm815, %v783, %v814
        %v817 = vsel %vm455, %v816, 0
        %819 = vmatprep.subr.mxu0 0.0
        %820 = vmatpush1.msra.mxu0 %v784
        %821 = vmatprep.subr.mxu0 0.0
        %822 = vmatpush1.msra.mxu0 %v785
        %823 = vmatprep.subr.mxu0 0.0
        %824 = vmatpush1.msra.mxu0 %v786
        %825 = vmatprep.subr.mxu0 0.0
        %826 = vmatpush1.msra.mxu0 %v787
        %827 = vmatprep.subr.mxu0 0.0
        %828 = vmatpush1.msra.mxu0 0.0
        %829 = vmatprep.subr.mxu0 0.0
        %830 = vmatpush1.msra.mxu0 0.0
        %831 = vmatprep.subr.mxu0 0.0
        %832 = vmatpush1.msra.mxu0 0.0
        %833 = vmatprep.subr.mxu0 0.0
        %834 = vmatpush1.msra.mxu0 0.0
        %835 = vmatprep.subr.mxu0 0.0
        %836 = vmatpush1.msra.mxu0 0.0
        %837 = vmatprep.subr.mxu0 0.0
        %838 = vmatpush1.msra.mxu0 0.0
        %839 = vmatprep.subr.mxu0 0.0
        %840 = vmatpush1.msra.mxu0 0.0
        %841 = vmatprep.subr.mxu0 0.0
        %842 = vmatpush1.msra.mxu0 0.0
        %843 = vmatprep.subr.mxu0 0.0
        %844 = vmatpush1.msra.mxu0 0.0
        %845 = vmatprep.subr.mxu0 0.0
        %846 = vmatpush1.msra.mxu0 0.0
        %847 = vmatprep.subr.mxu0 0.0
        %848 = vmatpush1.msra.mxu0 0.0
        %849 = vmatprep.subr.mxu0 0.0
        %850 = vmatpush1.msra.mxu0 0.0
        %851 = vmatprep.subr.mxu0 0.0
        %852 = vmatpush1.msra.mxu0 0.0
        %853 = vmatprep.subr.mxu0 0.0
        %854 = vmatpush1.msra.mxu0 0.0
        %855 = vmatprep.subr.mxu0 0.0
        %856 = vmatpush1.msra.mxu0 0.0
        %857 = vmatprep.subr.mxu0 0.0
        %858 = vmatpush1.msra.mxu0 0.0
        %859 = vmatprep.subr.mxu0 0.0
        %860 = vmatpush1.msra.mxu0 0.0
        %861 = vmatprep.subr.mxu0 0.0
        %862 = vmatpush1.msra.mxu0 0.0
        %863 = vmatprep.subr.mxu0 0.0
        %864 = vmatpush1.msra.mxu0 0.0
        %865 = vmatprep.subr.mxu0 0.0
        %866 = vmatpush1.msra.mxu0 0.0
        %867 = vmatprep.subr.mxu0 0.0
        %868 = vmatpush1.msra.mxu0 0.0
        %869 = vmatprep.subr.mxu0 0.0
        %870 = vmatpush1.msra.mxu0 0.0
        %871 = vmatprep.subr.mxu0 0.0
        %872 = vmatpush1.msra.mxu0 0.0
        %873 = vmatprep.subr.mxu0 0.0
        %874 = vmatpush1.msra.mxu0 0.0
        %875 = vmatprep.subr.mxu0 0.0
        %876 = vmatpush1.msra.mxu0 0.0
        %877 = vmatprep.subr.mxu0 0.0
        %878 = vmatpush1.msra.mxu0 0.0
        %879 = vmatprep.subr.mxu0 0.0
        %880 = vmatpush1.msra.mxu0 0.0
        %881 = vmatprep.subr.mxu0 0.0
        %882 = vmatpush1.msra.mxu0 0.0
        %883 = vmatprep.mubr.f32.mxu0 0.0
        %884 = vmatmul.mubr.f32.gmra.mrb[0].mxu0 %v817
        %v885 = vpop.f32.mrb[0].mxu0
        %v886 = vadd.f32 %v793, %v885
        %v887 = vpop.f32.mrb[0].mxu0
        %888 = vdwg.mxu0
        %v889 = vmax.f32 %v886, 0.0
        %v890 = vld [vmem:[%s8] sm:$0xff]
        %v891 = vld [vmem:[%s8 + $0x8] sm:$0xff]
        %v892 = vld [vmem:[%s8 + $0x10] sm:$0xff]
        %v893 = vld [vmem:[%s8 + $0x18] sm:$0xff]
        %v895 = vsel %vm455, %v720, 0
        %v898 = vsel %vm455, %v721, 0
        %v901 = vsel %vm455, %v722, 0
        %v904 = vsel %vm455, %v723, 0
        %v907 = vsel %vm455, %v724, 0
        %v910 = vsel %vm455, %v725, 0
        %v913 = vsel %vm455, %v726, 0
        %v916 = vsel %vm455, %v727, 0
        %v919 = vsel %vm455, %v889, 0
        %921 = vmatprep.subr.mxu0 0.0
        %922 = vmatpush1.msra.mxu0 %v890
        %923 = vmatprep.subr.mxu0 0.0
        %924 = vmatpush1.msra.mxu0 %v891
        %925 = vmatprep.subr.mxu0 0.0
        %926 = vmatpush1.msra.mxu0 %v892
        %927 = vmatprep.subr.mxu0 0.0
        %928 = vmatpush1.msra.mxu0 %v893
        %929 = vmatprep.subr.mxu0 0.0
        %930 = vmatpush1.msra.mxu0 0.0
        %931 = vmatprep.subr.mxu0 0.0
        %932 = vmatpush1.msra.mxu0 0.0
        %933 = vmatprep.subr.mxu0 0.0
        %934 = vmatpush1.msra.mxu0 0.0
        %935 = vmatprep.subr.mxu0 0.0
        %936 = vmatpush1.msra.mxu0 0.0
        %937 = vmatprep.subr.mxu0 0.0
        %938 = vmatpush1.msra.mxu0 0.0
        %939 = vmatprep.subr.mxu0 0.0
        %940 = vmatpush1.msra.mxu0 0.0
        %941 = vmatprep.subr.mxu0 0.0
        %942 = vmatpush1.msra.mxu0 0.0
        %943 = vmatprep.subr.mxu0 0.0
        %944 = vmatpush1.msra.mxu0 0.0
        %945 = vmatprep.subr.mxu0 0.0
        %946 = vmatpush1.msra.mxu0 0.0
        %947 = vmatprep.subr.mxu0 0.0
        %948 = vmatpush1.msra.mxu0 0.0
        %949 = vmatprep.subr.mxu0 0.0
        %950 = vmatpush1.msra.mxu0 0.0
        %951 = vmatprep.subr.mxu0 0.0
        %952 = vmatpush1.msra.mxu0 0.0
        %953 = vmatprep.subr.mxu0 0.0
        %954 = vmatpush1.msra.mxu0 0.0
        %955 = vmatprep.subr.mxu0 0.0
        %956 = vmatpush1.msra.mxu0 0.0
        %957 = vmatprep.subr.mxu0 0.0
        %958 = vmatpush1.msra.mxu0 0.0
        %959 = vmatprep.subr.mxu0 0.0
        %960 = vmatpush1.msra.mxu0 0.0
        %961 = vmatprep.subr.mxu0 0.0
        %962 = vmatpush1.msra.mxu0 0.0
        %963 = vmatprep.subr.mxu0 0.0
        %964 = vmatpush1.msra.mxu0 0.0
        %965 = vmatprep.subr.mxu0 0.0
        %966 = vmatpush1.msra.mxu0 0.0
        %967 = vmatprep.subr.mxu0 0.0
        %968 = vmatpush1.msra.mxu0 0.0
        %969 = vmatprep.subr.mxu0 0.0
        %970 = vmatpush1.msra.mxu0 0.0
        %971 = vmatprep.subr.mxu0 0.0
        %972 = vmatpush1.msra.mxu0 0.0
        %973 = vmatprep.subr.mxu0 0.0
        %974 = vmatpush1.msra.mxu0 0.0
        %975 = vmatprep.subr.mxu0 0.0
        %976 = vmatpush1.msra.mxu0 0.0
        %977 = vmatprep.subr.mxu0 0.0
        %978 = vmatpush1.msra.mxu0 0.0
        %979 = vmatprep.subr.mxu0 0.0
        %980 = vmatpush1.msra.mxu0 0.0
        %981 = vmatprep.subr.mxu0 0.0
        %982 = vmatpush1.msra.mxu0 0.0
        %983 = vmatprep.subr.mxu0 0.0
        %984 = vmatpush1.msra.mxu0 0.0
        %985 = vmatprep.mubr.f32.mxu0 0.0
        %986 = vmatmul.mubr.f32.gmra.mrb[0].mxu0 %v895
        %v987 = vpop.f32.mrb[0].mxu0
        %v988 = vadd.f32 0.0, %v987
        %v989 = vpop.f32.mrb[0].mxu0
        %990 = vmatprep.mubr.f32.mxu0 0.0
        %991 = vmatmul.mubr.f32.gmra.mrb[0].mxu0 %v898
        %v992 = vpop.f32.mrb[0].mxu0
        %v993 = vadd.f32 0.0, %v992
        %v994 = vpop.f32.mrb[0].mxu0
        %995 = vmatprep.mubr.f32.mxu0 0.0
        %996 = vmatmul.mubr.f32.gmra.mrb[0].mxu0 %v901
        %v997 = vpop.f32.mrb[0].mxu0
        %v998 = vadd.f32 0.0, %v997
        %v999 = vpop.f32.mrb[0].mxu0
        %1000 = vmatprep.mubr.f32.mxu0 0.0
        %1001 = vmatmul.mubr.f32.gmra.mrb[0].mxu0 %v904
        %v1002 = vpop.f32.mrb[0].mxu0
        %v1003 = vadd.f32 0.0, %v1002
        %v1004 = vpop.f32.mrb[0].mxu0
        %1005 = vmatprep.mubr.f32.mxu0 0.0
        %1006 = vmatmul.mubr.f32.gmra.mrb[0].mxu0 %v907
        %v1007 = vpop.f32.mrb[0].mxu0
        %v1008 = vadd.f32 0.0, %v1007
        %v1009 = vpop.f32.mrb[0].mxu0
        %1010 = vmatprep.mubr.f32.mxu0 0.0
        %1011 = vmatmul.mubr.f32.gmra.mrb[0].mxu0 %v910
        %v1012 = vpop.f32.mrb[0].mxu0
        %v1013 = vadd.f32 0.0, %v1012
        %v1014 = vpop.f32.mrb[0].mxu0
        %1015 = vmatprep.mubr.f32.mxu0 0.0
        %1016 = vmatmul.mubr.f32.gmra.mrb[0].mxu0 %v913
        %v1017 = vpop.f32.mrb[0].mxu0
        %v1018 = vadd.f32 0.0, %v1017
        %v1019 = vpop.f32.mrb[0].mxu0
        %1020 = vmatprep.mubr.f32.mxu0 0.0
        %1021 = vmatmul.mubr.f32.gmra.mrb[0].mxu0 %v916
        %v1022 = vpop.f32.mrb[0].mxu0
        %v1023 = vadd.f32 0.0, %v1022
        %v1024 = vpop.f32.mrb[0].mxu0
        %1025 = vmatprep.mubr.f32.mxu0 0.0
        %1026 = vmatmul.mubr.f32.gmra.mrb[0].mxu0 %v919
        %v1027 = vpop.f32.mrb[0].mxu0
        %v1028 = vadd.f32 0.0, %v1027
        %v1029 = vpop.f32.mrb[0].mxu0
        %1030 = vdwg.mxu0
        %v1032 = vcombine.high %v1028, %v1028
        %v1034 = vunpack.c.l.s4 1966171168
        %v1035 = vunpack.c.0.s8 %v1034
        %v1036 = vlaneseq
        %v1037 = vshrl.u32 %v1036, 7
        %v1038 = vsub.s32 %v1035, %v1037
        %v1039 = vrot.slane %v1028, %v1038
        %v1041 = vunpack.c.l.s4 1966171168
        %v1042 = vunpack.c.0.s8 %v1041
        %v1043 = vlaneseq
        %v1044 = vshrl.u32 %v1043, 7
        %v1045 = vsub.s32 %v1042, %v1044
        %v1046 = vrot.slane %v1032, %v1045
        %v1047 = vcombine.high %v1039, %v1039
        %v1048 = vcombine.high %v1046, %v1046
        %v1050 = vunpack.c.l.s4 1966171168
        %v1051 = vunpack.c.0.s8 %v1050
        %v1052 = vlaneseq
        %v1053 = vshrl.u32 %v1052, 7
        %v1054 = vsub.s32 %v1051, %v1053
        %v1055 = vrot.slane %v1039, %v1054
        %v1057 = vunpack.c.l.s4 1966171168
        %v1058 = vunpack.c.0.s8 %v1057
        %v1059 = vlaneseq
        %v1060 = vshrl.u32 %v1059, 7
        %v1061 = vsub.s32 %v1058, %v1060
        %v1062 = vrot.slane %v1046, %v1061
        %v1064 = vunpack.c.l.s4 1966171168
        %v1065 = vunpack.c.0.s8 %v1064
        %v1066 = vlaneseq
        %v1067 = vshrl.u32 %v1066, 7
        %v1068 = vsub.s32 %v1065, %v1067
        %v1069 = vrot.slane %v1047, %v1068
        %v1071 = vunpack.c.l.s4 1966171168
        %v1072 = vunpack.c.0.s8 %v1071
        %v1073 = vlaneseq
        %v1074 = vshrl.u32 %v1073, 7
        %v1075 = vsub.s32 %v1072, %v1074
        %v1076 = vrot.slane %v1048, %v1075
        %v1077 = vcombine.high %v1055, %v1055
        %v1078 = vcombine.high %v1062, %v1062
        %v1079 = vcombine.high %v1069, %v1069
        %v1080 = vcombine.high %v1076, %v1076
        %v1081 = vlaneseq
        %v1082 = vshrl.u32 %v1081, 7
        %v1083 = vsub.s32 0, %v1082
        %v1084 = vrot.slane %v1055, %v1083
        %v1085 = vlaneseq
        %v1086 = vshrl.u32 %v1085, 7
        %v1087 = vsub.s32 0, %v1086
        %v1088 = vrot.slane %v1069, %v1087
        %v1089 = vlaneseq
        %v1090 = vshrl.u32 %v1089, 7
        %v1091 = vsub.s32 0, %v1090
        %v1092 = vrot.slane %v1077, %v1091
        %v1093 = vlaneseq
        %v1094 = vshrl.u32 %v1093, 7
        %v1095 = vsub.s32 0, %v1094
        %v1096 = vrot.slane %v1079, %v1095
        %v1097 = vlaneseq
        %v1098 = vshrl.u32 %v1097, 7
        %v1099 = vsub.s32 0, %v1098
        %v1100 = vrot.slane %v1062, %v1099
        %v1101 = vlaneseq
        %v1102 = vshrl.u32 %v1101, 7
        %v1103 = vsub.s32 0, %v1102
        %v1104 = vrot.slane %v1076, %v1103
        %v1105 = vlaneseq
        %v1106 = vshrl.u32 %v1105, 7
        %v1107 = vsub.s32 0, %v1106
        %v1108 = vrot.slane %v1078, %v1107
        %v1109 = vlaneseq
        %v1110 = vshrl.u32 %v1109, 7
        %v1111 = vsub.s32 0, %v1110
        %v1112 = vrot.slane %v1080, %v1111
        %v1121 = vadd.f32 %v988, %v1084
        %v1122 = vadd.f32 %v993, %v1088
        %v1123 = vadd.f32 %v998, %v1092
        %v1124 = vadd.f32 %v1003, %v1096
        %v1125 = vadd.f32 %v1008, %v1100
        %v1126 = vadd.f32 %v1013, %v1104
        %v1127 = vadd.f32 %v1018, %v1108
        %v1128 = vadd.f32 %v1023, %v1112
        %v1129 = vadd.f32 %v1121, %v1028
        %v1130 = vadd.f32 %v1122, %v1028
        %v1131 = vadd.f32 %v1123, %v1028
        %v1132 = vadd.f32 %v1124, %v1028
        %v1133 = vadd.f32 %v1125, %v1028
        %v1134 = vadd.f32 %v1126, %v1028
        %v1135 = vadd.f32 %v1127, %v1028
        %v1136 = vadd.f32 %v1128, %v1028
        %v1137 = vld [vmem:[%s9] sm:$0x1]
        %v1139 = vlaneseq
        %v1140 = vshrl.u32 %v1139, 7
        %v1141 = vsub.s32 0, %v1140
        %v1142 = vrot.slane %v1137, %v1141
        %v1144 = vadd.f32 %v1129, %v1142
        %v1145 = vadd.f32 %v1130, %v1142
        %v1146 = vadd.f32 %v1131, %v1142
        %v1147 = vadd.f32 %v1132, %v1142
        %v1148 = vadd.f32 %v1133, %v1142
        %v1149 = vadd.f32 %v1134, %v1142
        %v1150 = vadd.f32 %v1135, %v1142
        %v1151 = vadd.f32 %v1136, %v1142
        %v1152 = vcombine.low %v1144, %v1146
        %v1153 = vcombine.high %v1144, %v1146
        %v1155 = vunpack.c.l.s4 1983009808
        %v1156 = vunpack.c.0.s8 %v1155
        %v1157 = vlaneseq
        %v1158 = vshrl.u32 %v1157, 7
        %v1159 = vsub.s32 %v1156, %v1158
        %v1160 = vrot.slane %v1152, %v1159
        %v1162 = vunpack.c.l.s4 1983009808
        %v1163 = vunpack.c.0.s8 %v1162
        %v1164 = vlaneseq
        %v1165 = vshrl.u32 %v1164, 7
        %v1166 = vsub.s32 %v1163, %v1165
        %v1167 = vrot.slane %v1153, %v1166
        %v1168 = vcombine.low %v1145, %v1147
        %v1169 = vcombine.high %v1145, %v1147
        %v1171 = vunpack.c.l.s4 1983009808
        %v1172 = vunpack.c.0.s8 %v1171
        %v1173 = vlaneseq
        %v1174 = vshrl.u32 %v1173, 7
        %v1175 = vsub.s32 %v1172, %v1174
        %v1176 = vrot.slane %v1168, %v1175
        %v1178 = vunpack.c.l.s4 1983009808
        %v1179 = vunpack.c.0.s8 %v1178
        %v1180 = vlaneseq
        %v1181 = vshrl.u32 %v1180, 7
        %v1182 = vsub.s32 %v1179, %v1181
        %v1183 = vrot.slane %v1169, %v1182
        %v1184 = vcombine.low %v1148, %v1150
        %v1185 = vcombine.high %v1148, %v1150
        %v1187 = vunpack.c.l.s4 1983009808
        %v1188 = vunpack.c.0.s8 %v1187
        %v1189 = vlaneseq
        %v1190 = vshrl.u32 %v1189, 7
        %v1191 = vsub.s32 %v1188, %v1190
        %v1192 = vrot.slane %v1184, %v1191
        %v1194 = vunpack.c.l.s4 1983009808
        %v1195 = vunpack.c.0.s8 %v1194
        %v1196 = vlaneseq
        %v1197 = vshrl.u32 %v1196, 7
        %v1198 = vsub.s32 %v1195, %v1197
        %v1199 = vrot.slane %v1185, %v1198
        %v1200 = vcombine.low %v1149, %v1151
        %v1201 = vcombine.high %v1149, %v1151
        %v1203 = vunpack.c.l.s4 1983009808
        %v1204 = vunpack.c.0.s8 %v1203
        %v1205 = vlaneseq
        %v1206 = vshrl.u32 %v1205, 7
        %v1207 = vsub.s32 %v1204, %v1206
        %v1208 = vrot.slane %v1200, %v1207
        %v1210 = vunpack.c.l.s4 1983009808
        %v1211 = vunpack.c.0.s8 %v1210
        %v1212 = vlaneseq
        %v1213 = vshrl.u32 %v1212, 7
        %v1214 = vsub.s32 %v1211, %v1213
        %v1215 = vrot.slane %v1201, %v1214
        %v1216 = vcombine.low %v1160, %v1176
        %v1217 = vcombine.high %v1160, %v1176
        %v1219 = vunpack.c.l.s4 1934713408
        %v1220 = vunpack.c.0.s8 %v1219
        %v1221 = vlaneseq
        %v1222 = vshrl.u32 %v1221, 7
        %v1223 = vsub.s32 %v1220, %v1222
        %v1224 = vrot.slane %v1216, %v1223
        %v1226 = vunpack.c.l.s4 1934713408
        %v1227 = vunpack.c.0.s8 %v1226
        %v1228 = vlaneseq
        %v1229 = vshrl.u32 %v1228, 7
        %v1230 = vsub.s32 %v1227, %v1229
        %v1231 = vrot.slane %v1217, %v1230
        %v1232 = vcombine.low %v1167, %v1183
        %v1233 = vcombine.high %v1167, %v1183
        %v1235 = vunpack.c.l.s4 1934713408
        %v1236 = vunpack.c.0.s8 %v1235
        %v1237 = vlaneseq
        %v1238 = vshrl.u32 %v1237, 7
        %v1239 = vsub.s32 %v1236, %v1238
        %v1240 = vrot.slane %v1232, %v1239
        %v1242 = vunpack.c.l.s4 1934713408
        %v1243 = vunpack.c.0.s8 %v1242
        %v1244 = vlaneseq
        %v1245 = vshrl.u32 %v1244, 7
        %v1246 = vsub.s32 %v1243, %v1245
        %v1247 = vrot.slane %v1233, %v1246
        %v1248 = vcombine.low %v1192, %v1208
        %v1249 = vcombine.high %v1192, %v1208
        %v1251 = vunpack.c.l.s4 1934713408
        %v1252 = vunpack.c.0.s8 %v1251
        %v1253 = vlaneseq
        %v1254 = vshrl.u32 %v1253, 7
        %v1255 = vsub.s32 %v1252, %v1254
        %v1256 = vrot.slane %v1248, %v1255
        %v1258 = vunpack.c.l.s4 1934713408
        %v1259 = vunpack.c.0.s8 %v1258
        %v1260 = vlaneseq
        %v1261 = vshrl.u32 %v1260, 7
        %v1262 = vsub.s32 %v1259, %v1261
        %v1263 = vrot.slane %v1249, %v1262
        %v1264 = vcombine.low %v1199, %v1215
        %v1265 = vcombine.high %v1199, %v1215
        %v1267 = vunpack.c.l.s4 1934713408
        %v1268 = vunpack.c.0.s8 %v1267
        %v1269 = vlaneseq
        %v1270 = vshrl.u32 %v1269, 7
        %v1271 = vsub.s32 %v1268, %v1270
        %v1272 = vrot.slane %v1264, %v1271
        %v1274 = vunpack.c.l.s4 1934713408
        %v1275 = vunpack.c.0.s8 %v1274
        %v1276 = vlaneseq
        %v1277 = vshrl.u32 %v1276, 7
        %v1278 = vsub.s32 %v1275, %v1277
        %v1279 = vrot.slane %v1265, %v1278
        %v1280 = vcombine.low %v1224, %v1256
        %v1281 = vcombine.high %v1224, %v1256
        %v1282 = vcombine.low %v1231, %v1263
        %v1283 = vcombine.high %v1231, %v1263
        %v1284 = vcombine.low %v1240, %v1272
        %v1285 = vcombine.high %v1240, %v1272
        %v1286 = vcombine.low %v1247, %v1279
        %v1287 = vcombine.high %v1247, %v1279
        %1289 = vrot.lane.b32.xlu0 %v1281, 16
        %v1290 = vpop.permute.xlu0 %1289
        %1293 = vrot.lane.b32.xlu0 %v1282, 32
        %v1294 = vpop.permute.xlu0 %1293
        %1297 = vrot.lane.b32.xlu0 %v1283, 48
        %v1298 = vpop.permute.xlu0 %1297
        %1301 = vrot.lane.b32.xlu0 %v1284, 64
        %v1302 = vpop.permute.xlu0 %1301
        %1305 = vrot.lane.b32.xlu0 %v1285, 80
        %v1306 = vpop.permute.xlu0 %1305
        %1309 = vrot.lane.b32.xlu0 %v1286, 96
        %v1310 = vpop.permute.xlu0 %1309
        %1313 = vrot.lane.b32.xlu0 %v1287, 112
        %v1314 = vpop.permute.xlu0 %1313
        %vm1316 = vcmask 130048
        %v1317 = vsel %vm1316, %v1280, %v1290
        %v1318 = vsel %vm455, %v1317, %v1294
        %vm1319 = vcmask 392192
        %v1320 = vsel %vm1319, %v1318, %v1298
        %vm1321 = vcmask 523264
        %v1322 = vsel %vm1321, %v1320, %v1302
        %vm1323 = vcmask 654336
        %v1324 = vsel %vm1323, %v1322, %v1306
        %vm1325 = vcmask 785408
        %v1326 = vsel %vm1325, %v1324, %v1310
        %vm1327 = vcmask 916480
        %v1328 = vsel %vm1327, %v1326, %v1314
        %1329 = vst [vmem:[%s442] sm:$0xff] %v1328
        %s1330 = sand.u32 %s274, 1
        %s1331 = scalar_lea.sflag [#allocation4], %s1330
        %s1332 = sand.u32 %s274, 1
        %s1333 = smul.addr %s1332, 8
        %s1334 = scalar_lea.vmem [#allocation8], %s1333
        // Predicated region
        $region73: #{tpu_custom_call.1} parent=59 // pred_check
          %p1335 = pneg %p284
        $region74: #{tpu_custom_call.1} parent=59 // pred_check_branch
          %1337 = sbr.rel (%p1335) target = $region76
        $region75: #{tpu_custom_call.1} parent=59 // pred_region
          %s1339 = ssub.s32 128, 128
          %1340 = vsyncadd %s1331, %s1339
          %s1341 = sadd.s32 %s35, %s34
          %s1342 = smul.addr %s1341, 128
          %s1343 = scalar_lea.hbm %s10, %s1342
          %s1345 = sshll.u32 %s1334, 4
          %s1346 = int_to_ptr.vmem [resolvable:$true] %s1345
          %1348 = dma.vmem_to_hbm [thread:$0]  %s1346, 128, %s1343, %s1331
        $region76: #{tpu_custom_call.1} parent=59 // pred_fallthru
          _
      $region60: #{tpu_custom_call.1} parent=5 // pred_fallthru
        _
      %p1349 = scmp.le.s32.totalorder 2, %s25
      // Predicated region
      $region77: #{tpu_custom_call.1} parent=5 // pred_check
        %p1350 = pneg %p1349
      $region78: #{tpu_custom_call.1} parent=5 // pred_check_branch
        %1352 = sbr.rel (%p1350) target = $region80
      $region79: #{tpu_custom_call.1} parent=5 // pred_region
        %s1353 = ssub.s32 %s25, 2
        // Predicated region
        $region81: #{tpu_custom_call.1} parent=79 // pred_check
          %p1354 = pneg %p290
        $region82: #{tpu_custom_call.1} parent=79 // pred_check_branch
          %1356 = sbr.rel (%p1354) target = $region84
        $region83: #{tpu_custom_call.1} parent=79 // pred_region
          %s1357 = sand.u32 %s275, 1
          %s1358 = scalar_lea.sflag [#allocation4], %s1357
          %s1359 = sand.u32 %s275, 1
          %s1360 = smul.addr %s1359, 8
          %s1361 = scalar_lea.vmem [#allocation8], %s1360
          %1362 = dma.done %s1358, 128
        $region84: #{tpu_custom_call.1} parent=79 // pred_fallthru
          _
      $region80: #{tpu_custom_call.1} parent=5 // pred_fallthru
        _
    $region6: #{tpu_custom_call.1} parent=1 // loop_footer
      %s29 = sadd.s32 1, %s25
    $region7: #{tpu_custom_call.1} parent=1 // loop_footer_branch
      %24 = sbr.rel target = $region3
    $region8: #{tpu_custom_call.1} parent=1 // loop_exit
      _
    %1363 = vsyncpa [#allocation3], 1
    %s1364 = scalar_lea.sflag [#allocation3], 1
    %1365 = vsyncpa %s1364, 1
    %1366 = vsyncpa [#allocation6], 1
    %s1367 = scalar_lea.sflag [#allocation6], 1
    %1368 = vsyncpa %s1367, 1
    %1369 = vsyncpa [#allocation4], 1
    %s1370 = scalar_lea.sflag [#allocation4], 1
    %1371 = vsyncpa %s1370, 1

</llo_original>
